<compile_context>
chip_gen: v5e
topology: v5e:2x2
jax: 0.10.0
libtpu: 0.0.40
codegen_flags: <defaults>
</compile_context>

<pallas_src>
import jax
import jax.numpy as jnp
from jax.experimental import pallas as pl
from jax.experimental.pallas import tpu as pltpu

# Small shapes implied by the module (channels preserved by the conv branch).
N, C, H, W = 2, 4, 16, 16
K, STRIDE, PAD = 3, 2, 1
HO = (H + 2 * PAD - K) // STRIDE + 1   # 8  (== H // 2, matches the pool output)
WO = (W + 2 * PAD - K) // STRIDE + 1   # 8

_VMEM_SPEC = pl.BlockSpec(memory_space=pltpu.MemorySpace.VMEM)


# ----------------- pooling kernels: one stacked input, 3 VPU ops -------------
def _max_pool_kernel(x_ref, o_ref):
    # x_ref: (4, N, C*HO*WO) -- four 2x2 phases stacked on the leading axis
    # o_ref: (N, C*HO*WO)    -- lane-dense (2, 256), NCHW order
    o_ref[...] = jnp.maximum(jnp.maximum(x_ref[0], x_ref[1]),
                             jnp.maximum(x_ref[2], x_ref[3]))


def _avg_pool_kernel(x_ref, o_ref):
    o_ref[...] = (x_ref[0] + x_ref[1] + x_ref[2] + x_ref[3]) * 0.25


# ----------------- stride-2 conv kernel: one dense dot per batch sample ------
def _conv_down_kernel(p_ref, w_ref, b_ref, o_ref):
    # p_ref : (N, K*K*C, HO*WO) = (2, 36, 64)   im2col patches (built in wrapper)
    # w_ref : (C_out, K*K*C)    = (4, 36)       flat PyTorch OIHW weight
    # b_ref : (C_out, 1)
    # o_ref : (N, C_out, HO*WO) = (2, 4, 64)    NCHW order (free reshape outside)
    w = w_ref[...]
    b = b_ref[...]
    for n in range(N):                      # static -> fully unrolled (2 dots)
        o_ref[n] = jnp.dot(w, p_ref[n],
                           preferred_element_type=jnp.float32) + b


# ----------------- wrappers ---------------------------------------------------
def _pool_phases(x_nchw):
    # 2x2 / stride-2 window extraction as a single stacked (4, N, C*HO*WO) slab.
    x4 = x_nchw.reshape(N, C, HO, 2, WO, 2)            # [n,c,i,a,j,b]
    ph = jnp.transpose(x4, (3, 5, 0, 1, 2, 4))         # [a,b,n,c,i,j]
    return ph.reshape(2 * 2, N, C * HO * WO)           # (4, 2, 256)


def _im2col(x_nchw):
    # Patch slab p[n, cin*9 + kh*3 + kw, ho*WO + wo] = x_pad[n, cin, 2ho+kh, 2wo+kw]
    xp = jnp.pad(x_nchw, ((0, 0), (0, 0), (PAD, PAD), (PAD, PAD)))   # (N,C,18,18)
    taps = [xp[:, :, kh:kh + 2 * HO:2, kw:kw + 2 * WO:2]
            for kh in range(K) for kw in range(K)]                   # 9 x (N,C,HO,WO)
    p = jnp.stack(taps, axis=2)                                      # (N,C,9,HO,WO)
    return p.reshape(N, C * K * K, HO * WO)                          # (2, 36, 64)


def down_sample(x, mode, weight=None, bias=None):
    """Forward of DownSample(mode). x is NCHW float32."""
    assert mode in ("ave", "max", "conv")
    x = x.astype(jnp.float32)

    if mode in ("ave", "max"):
        kern = _avg_pool_kernel if mode == "ave" else _max_pool_kernel
        out = pl.pallas_call(
            kern,
            out_shape=jax.ShapeDtypeStruct((N, C * HO * WO), jnp.float32),
            in_specs=[_VMEM_SPEC],
            out_specs=_VMEM_SPEC,
        )(_pool_phases(x))
        return out.reshape(N, C, HO, WO)            # free metadata reshape

    # conv path: Conv2d(C, C, kernel_size=3, stride=2, padding=1)
    # weight is PyTorch OIHW (C_out, C_in, K, K); flatten directly (no transpose).
    p = _im2col(x)                                                    # (2, 36, 64)
    w_flat = weight.astype(jnp.float32).reshape(C, C * K * K)         # (4, 36)
    b2 = bias.astype(jnp.float32).reshape(C, 1)                       # (4, 1)

    out = pl.pallas_call(
        _conv_down_kernel,
        out_shape=jax.ShapeDtypeStruct((N, C, HO * WO), jnp.float32),
        in_specs=[_VMEM_SPEC] * 3,
        out_specs=_VMEM_SPEC,
    )(p, w_flat, b2)
    return out.reshape(N, C, HO, WO)                # free metadata reshape, NCHW


# ----------------- references ------------------------------------------------
def ref_conv(x, w, b):
    y = jax.lax.conv_general_dilated(
        x, w, window_strides=(STRIDE, STRIDE),
        padding=((PAD, PAD), (PAD, PAD)),
        dimension_numbers=("NCHW", "OIHW", "NCHW"))
    return y + b.reshape(1, C, 1, 1)


def ref_max(x):
    return jax.lax.reduce_window(x, -jnp.inf, jax.lax.max,
                                 (1, 1, 2, 2), (1, 1, 2, 2), "VALID")


def ref_avg(x):
    s = jax.lax.reduce_window(x, 0.0, jax.lax.add,
                              (1, 1, 2, 2), (1, 1, 2, 2), "VALID")
    return s * 0.25


if __name__ == "__main__":
    key = jax.random.PRNGKey(0)
    kx, kw, kb = jax.random.split(key, 3)
    x = jax.random.normal(kx, (N, C, H, W), jnp.float32)
    w = 0.1 * jax.random.normal(kw, (C, C, K, K), jnp.float32)   # Conv2d(C->C, 3)
    b = 0.1 * jax.random.normal(kb, (C,), jnp.float32)

    outs = {
        "ave": down_sample(x, "ave"),
        "max": down_sample(x, "max"),
        "conv": down_sample(x, "conv", w, b),
    }
    outs = jax.block_until_ready(outs)

    refs = {"ave": ref_avg(x), "max": ref_max(x), "conv": ref_conv(x, w, b)}
    for mode in ("ave", "max", "conv"):
        assert outs[mode].shape == refs[mode].shape == (N, C, HO, WO)
        max_err = float(jnp.max(jnp.abs(outs[mode] - refs[mode])))
        assert jnp.allclose(outs[mode], refs[mode], rtol=2e-3, atol=2e-3), \
            f"{mode}: max_err={max_err}"
    print("KERNEL_OK")
</pallas_src>

<mosaic_0001>
module attributes {stable_mosaic.version = 11 : i64} {
  func.func @_avg_pool_kernel(%arg0: memref<4x2x256xf32, #tpu.memory_space<vmem>>, %arg1: memref<2x256xf32, #tpu.memory_space<vmem>>) attributes {dimension_semantics = [], scalar_prefetch = 0 : i64, scratch_operands = 0 : i64, tpu.core_type = #tpu.core_type<tc>} {
    %c0 = arith.constant 0 : index
    %c0_0 = arith.constant 0 : index
    %c0_1 = arith.constant 0 : index
    %0 = vector.load %arg0[%c0, %c0_0, %c0_1] : memref<4x2x256xf32, #tpu.memory_space<vmem>>, vector<1x2x256xf32>
    %1 = vector.shape_cast %0 : vector<1x2x256xf32> to vector<2x256xf32>
    %c1 = arith.constant 1 : index
    %c0_2 = arith.constant 0 : index
    %c0_3 = arith.constant 0 : index
    %2 = vector.load %arg0[%c1, %c0_2, %c0_3] : memref<4x2x256xf32, #tpu.memory_space<vmem>>, vector<1x2x256xf32>
    %3 = vector.shape_cast %2 : vector<1x2x256xf32> to vector<2x256xf32>
    %4 = arith.addf %1, %3 : vector<2x256xf32>
    %c2 = arith.constant 2 : index
    %c0_4 = arith.constant 0 : index
    %c0_5 = arith.constant 0 : index
    %5 = vector.load %arg0[%c2, %c0_4, %c0_5] : memref<4x2x256xf32, #tpu.memory_space<vmem>>, vector<1x2x256xf32>
    %6 = vector.shape_cast %5 : vector<1x2x256xf32> to vector<2x256xf32>
    %7 = arith.addf %4, %6 : vector<2x256xf32>
    %c3 = arith.constant 3 : index
    %c0_6 = arith.constant 0 : index
    %c0_7 = arith.constant 0 : index
    %8 = vector.load %arg0[%c3, %c0_6, %c0_7] : memref<4x2x256xf32, #tpu.memory_space<vmem>>, vector<1x2x256xf32>
    %9 = vector.shape_cast %8 : vector<1x2x256xf32> to vector<2x256xf32>
    %10 = arith.addf %7, %9 : vector<2x256xf32>
    %cst = arith.constant 2.500000e-01 : f32
    %11 = vector.broadcast %cst : f32 to vector<2x256xf32>
    %12 = arith.mulf %10, %11 : vector<2x256xf32>
    %c0_8 = arith.constant 0 : index
    %c0_9 = arith.constant 0 : index
    %13 = vector.load %arg1[%c0_8, %c0_9] : memref<2x256xf32, #tpu.memory_space<vmem>>, vector<2x256xf32>
    tpu.vector_store %arg1[%c0_8, %c0_9], %12 {strides = array<i32>} : memref<2x256xf32, #tpu.memory_space<vmem>>, vector<2x256xf32>,
    return
  }
}

</mosaic_0001>

<llo_original>
// kernel: tpu_custom_call.1
$region0: #{tpu_custom_call.1}
  #allocation0 [shape = 'u32[]', space=smem, size = 0x4, offset = 0x4, fixed_abs, tag = 'smem constant byte address 0x4 - core index']
  #allocation1 [shape = 'u32[72,128]{1,0:T(1,128)}', space=vmem, size = 0x9000, scoped, tag = 'internal scratch']
  %s0 = inlined_call_operand.hbm [shape: f32[4,2,256], index: 0, kind: input, shape index: {}]
  %s1 = inlined_call_operand.hbm [shape: f32[2,256], index: 1, kind: output, shape index: {}]
  %s2 = sld [smem:[#allocation0]]
  $region18: #{tpu_custom_call.1} parent=0
    _
  %s4 = ssub.s32 1, %s2
  %s5 = scalar_select 0, %s4, %s2
  $region1: #{tpu_custom_call.1} parent=0
    #allocation2 [shape = 'u8[8192]{0}', space=vmem, size = 0x2000, scoped, tag = 'input window, operand 0, single buffered']
    #allocation3 [shape = 's32[1]{0}', space=sflag, size = 0x4, scoped, tag = 'scoped memory for tpu_custom_call.1']
    #allocation4 [shape = 's32[1]{0}', space=sflag, size = 0x4, scoped, tag = 'scoped memory for tpu_custom_call.1']
    #allocation5 [shape = 'u8[2048]{0}', space=vmem, size = 0x800, scoped, tag = 'output window, operand 0, single buffered']
    %6 = vsyncpa [#allocation3], 0
    %7 = vsyncpa [#allocation4], 0
    // Predicated region
    $region2: #{tpu_custom_call.1} parent=1 // pred_check
      _
    $region3: #{tpu_custom_call.1} parent=1 // pred_check_branch
      %9 = sbr.rel (0) target = $region5
    $region4: #{tpu_custom_call.1} parent=1 // pred_region
      %11 = vsyncadd [#allocation3], 0
      %s12 = sshll.u32 %s0, 4
      %s13 = int_to_ptr.hbm [resolvable:$true] %s12
      %s14 = sshll.u32 [#allocation2], 4
      %s15 = int_to_ptr.vmem [resolvable:$true] %s14
      %20 = dma.hbm_to_vmem [thread:$0]  %s13, 256, %s15, [#allocation3], 64, 64, 4
    $region5: #{tpu_custom_call.1} parent=1 // pred_fallthru
      _
    // Predicated region
    $region6: #{tpu_custom_call.1} parent=1 // pred_check
      _
    $region7: #{tpu_custom_call.1} parent=1 // pred_check_branch
      %22 = sbr.rel (0) target = $region9
    $region8: #{tpu_custom_call.1} parent=1 // pred_region
      %24 = dma.done [#allocation3], 256
    $region9: #{tpu_custom_call.1} parent=1 // pred_fallthru
      _
    %v25 = vld [vmem:[#allocation2] sm:$0xf]
    %s26 = scalar_lea.vmem [#allocation2], 4
    %v27 = vld [vmem:[%s26] sm:$0xf]
    %v28 = vadd.f32 %v25, %v27
    %s29 = scalar_lea.vmem [#allocation2], 8
    %v30 = vld [vmem:[%s29] sm:$0xf]
    %v31 = vadd.f32 %v28, %v30
    %s32 = scalar_lea.vmem [#allocation2], 12
    %v33 = vld [vmem:[%s32] sm:$0xf]
    %v34 = vadd.f32 %v31, %v33
    %v35 = vmul.f32 %v34, 0.25
    %36 = vst [vmem:[#allocation5] sm:$0xf] %v35
    // Predicated region
    $region10: #{tpu_custom_call.1} parent=1 // pred_check
      _
    $region11: #{tpu_custom_call.1} parent=1 // pred_check_branch
      %38 = sbr.rel (0) target = $region13
    $region12: #{tpu_custom_call.1} parent=1 // pred_region
      %40 = vsyncadd [#allocation4], 0
      %s42 = sshll.u32 [#allocation5], 4
      %s43 = int_to_ptr.vmem [resolvable:$true] %s42
      %s44 = sshll.u32 %s1, 4
      %s45 = int_to_ptr.hbm [resolvable:$true] %s44
      %47 = dma.vmem_to_hbm [thread:$0]  %s43, 64, %s45, [#allocation4]
    $region13: #{tpu_custom_call.1} parent=1 // pred_fallthru
      _
    // Predicated region
    $region14: #{tpu_custom_call.1} parent=1 // pred_check
      _
    $region15: #{tpu_custom_call.1} parent=1 // pred_check_branch
      %49 = sbr.rel (0) target = $region17
    $region16: #{tpu_custom_call.1} parent=1 // pred_region
      %51 = dma.done [#allocation4], 64
    $region17: #{tpu_custom_call.1} parent=1 // pred_fallthru
      _
    %52 = vsyncpa [#allocation3], 1
    %53 = vsyncpa [#allocation4], 1

</llo_original>
